<compile_context>
chip_gen: v6e
topology: v6e:2x2x1
jax: 0.10.0
libtpu: 0.0.40
codegen_flags: <defaults>
</compile_context>

<pallas_src>
import jax
import jax.numpy as jnp
from jax.experimental import pallas as pl
from jax.experimental.pallas import tpu as pltpu


def encoder_kernel(tok_ref, embed_ref, wih_ref, brnn_ref, whh_ref,
                   w1_ref, b1_ref, w2_ref, b2_ref, out_ref, hid_ref):
    """Single invocation: fused embed-gather + input projection + serial RNN + MLP head.

    tok_ref   : (S*Bp, 1) int32, timestep-major (row i -> timestep i//Bp, batch i%Bp)
    embed_ref : (V, E)    embedding table
    wih_ref   : (E, H)    W_ih^T
    brnn_ref  : (1, H)    b_ih + b_hh
    whh_ref   : (H, H)    W_hh^T
    w1_ref    : (H, H)    linear1 weight^T      b1_ref: (1, H)
    w2_ref    : (H, Hd)   linear2 weight^T      b2_ref: (1, Hd)
    out_ref   : (Bp, S*H) RNN outputs, lane-dense batch-major slab (single writeback)
    hid_ref   : (Bp, Hd)  tanh(linear2(relu(linear1(h_n))))
    """
    N = tok_ref.shape[0]
    V, _ = embed_ref.shape
    H = whh_ref.shape[0]
    Bp = out_ref.shape[0]
    S = N // Bp

    # ---- Fused embedding gather (one-hot MXU matmul) + input projection (off the
    #      serial chain: no dependence on h). ----
    tok = tok_ref[...]                                               # (N, 1) int32
    iota = jax.lax.broadcasted_iota(jnp.int32, (N, V), 1)
    onehot = (iota == tok).astype(jnp.float32)                       # (N, V)
    emb = jnp.dot(onehot, embed_ref[...],
                  preferred_element_type=jnp.float32)                # (N, E)
    # TODO(synk): training-mode dropout mask on `emb` via pltpu.prng_seed/prng_random_bits.
    xproj = (jnp.dot(emb, wih_ref[...], preferred_element_type=jnp.float32)
             + brnn_ref[...])                                        # (N, H) timestep-major

    whh = whh_ref[...]                                               # loaded once

    # ---- Serial recurrence: only h @ W_hh^T + tanh on the latency-critical chain.
    #      t = 0: h_prev is zero, so h = tanh(xproj[0]) (skip the dead MXU push). ----
    h = jnp.tanh(xproj[0:Bp, :])                                     # (Bp, H)
    hs = [h]
    for t in range(1, S):                                            # S static & small
        h = jnp.tanh(xproj[t * Bp:(t + 1) * Bp, :]
                     + jnp.dot(h, whh, preferred_element_type=jnp.float32))
        hs.append(h)

    # ---- One lane-dense slab store (Bp, S*H): columns [s*H:(s+1)*H] hold timestep s. ----
    out_ref[...] = jnp.concatenate(hs, axis=1).astype(out_ref.dtype)

    # ---- MLP head on the final hidden state. ----
    z = jnp.maximum(
        jnp.dot(h, w1_ref[...], preferred_element_type=jnp.float32) + b1_ref[...],
        0.0,
    )
    hid_ref[...] = jnp.tanh(
        jnp.dot(z, w2_ref[...], preferred_element_type=jnp.float32) + b2_ref[...]
    ).astype(hid_ref.dtype)


def encoder_forward(tokens, params):
    """tokens: int32 (B, S).  Returns (output (B, S, H), hidden (1, B, Hd))."""
    B, S = tokens.shape
    V, E = params["embed"].shape
    H = params["w_hh"].shape[0]
    Hd = params["w2"].shape[0]

    # Pad batch to the 8-sublane width; padded rows use token 0 and are dropped afterwards.
    Bp = max(8, ((B + 7) // 8) * 8)
    tok_p = jnp.pad(tokens.astype(jnp.int32), ((0, Bp - B), (0, 0)))
    tok_tm = tok_p.T.reshape(S * Bp, 1)                              # timestep-major

    wih_t = params["w_ih"].T.astype(jnp.float32)                     # (E, H)
    b_rnn = (params["b_ih"] + params["b_hh"]).reshape(1, H).astype(jnp.float32)
    whh_t = params["w_hh"].T.astype(jnp.float32)                     # (H, H)
    w1_t = params["w1"].T.astype(jnp.float32)                        # (H, H)
    b1 = params["b1"].reshape(1, H).astype(jnp.float32)
    w2_t = params["w2"].T.astype(jnp.float32)                        # (H, Hd)
    b2 = params["b2"].reshape(1, Hd).astype(jnp.float32)

    vmem = pl.BlockSpec(memory_space=pltpu.MemorySpace.VMEM)
    out2d, hid2d = pl.pallas_call(
        encoder_kernel,
        out_shape=(
            jax.ShapeDtypeStruct((Bp, S * H), jnp.float32),
            jax.ShapeDtypeStruct((Bp, Hd), jnp.float32),
        ),
        in_specs=[vmem] * 9,                                         # whole arrays, loaded once
        out_specs=(vmem, vmem),                                      # single-slab writebacks
    )(tok_tm, params["embed"].astype(jnp.float32), wih_t, b_rnn, whh_t,
      w1_t, b1, w2_t, b2)

    output = out2d[:B].reshape(B, S, H)                              # batch-first, free reshape
    hidden = hid2d[:B][None, :, :]                                   # (1, B, Hd) like nn.RNN h_n
    return output, hidden


def make_params(key, input_size, emb_size, enc_hidden, dec_hidden):
    ks = jax.random.split(key, 9)
    u = lambda k, shape, s: jax.random.uniform(k, shape, jnp.float32, -s, s)
    s_rnn = 1.0 / jnp.sqrt(enc_hidden)
    return {
        "embed": jax.random.normal(ks[0], (input_size, emb_size), jnp.float32) * 0.1,
        "w_ih": u(ks[1], (enc_hidden, emb_size), s_rnn),
        "w_hh": u(ks[2], (enc_hidden, enc_hidden), s_rnn),
        "b_ih": u(ks[3], (enc_hidden,), s_rnn),
        "b_hh": u(ks[4], (enc_hidden,), s_rnn),
        "w1": u(ks[5], (enc_hidden, enc_hidden), 1.0 / jnp.sqrt(enc_hidden)),
        "b1": u(ks[6], (enc_hidden,), 1.0 / jnp.sqrt(enc_hidden)),
        "w2": u(ks[7], (dec_hidden, enc_hidden), 1.0 / jnp.sqrt(enc_hidden)),
        "b2": u(ks[8], (dec_hidden,), 1.0 / jnp.sqrt(enc_hidden)),
    }


if __name__ == "__main__":
    input_size, emb_size = 50, 32
    enc_hidden, dec_hidden = 32, 32
    batch, seq = 2, 8

    key = jax.random.PRNGKey(0)
    k_tok, k_par = jax.random.split(key)
    tokens = jax.random.randint(k_tok, (batch, seq), 0, input_size, dtype=jnp.int32)
    params = make_params(k_par, input_size, emb_size, enc_hidden, dec_hidden)

    output, hidden = jax.jit(encoder_forward)(tokens, params)
    jax.block_until_ready((output, hidden))

    assert output.shape == (batch, seq, enc_hidden)
    assert hidden.shape == (1, batch, dec_hidden)

    # Pure-JAX reference check (embedding -> RNN recurrence -> MLP head).
    emb = jnp.take(params["embed"], tokens, axis=0).astype(jnp.float32)

    def step(h, x_t):
        h_new = jnp.tanh(x_t @ params["w_ih"].T + h @ params["w_hh"].T
                         + params["b_ih"] + params["b_hh"])
        return h_new, h_new

    h_last, outs = jax.lax.scan(step, jnp.zeros((batch, enc_hidden), jnp.float32),
                                jnp.transpose(emb, (1, 0, 2)))
    ref_out = jnp.transpose(outs, (1, 0, 2))
    ref_hid = jnp.tanh(jnp.maximum(h_last @ params["w1"].T + params["b1"], 0.0)
                       @ params["w2"].T + params["b2"])[None]
    assert jnp.allclose(output, ref_out, atol=1e-5), "output mismatch"
    assert jnp.allclose(hidden, ref_hid, atol=1e-5), "hidden mismatch"

    print("KERNEL_OK")
</pallas_src>

<mosaic_0001>
module attributes {stable_mosaic.version = 11 : i64} {
  func.func @encoder_kernel(%arg0: memref<64x1xi32, #tpu.memory_space<vmem>>, %arg1: memref<50x32xf32, #tpu.memory_space<vmem>>, %arg2: memref<32x32xf32, #tpu.memory_space<vmem>>, %arg3: memref<1x32xf32, #tpu.memory_space<vmem>>, %arg4: memref<32x32xf32, #tpu.memory_space<vmem>>, %arg5: memref<32x32xf32, #tpu.memory_space<vmem>>, %arg6: memref<1x32xf32, #tpu.memory_space<vmem>>, %arg7: memref<32x32xf32, #tpu.memory_space<vmem>>, %arg8: memref<1x32xf32, #tpu.memory_space<vmem>>, %arg9: memref<8x256xf32, #tpu.memory_space<vmem>>, %arg10: memref<8x32xf32, #tpu.memory_space<vmem>>) attributes {dimension_semantics = [], scalar_prefetch = 0 : i64, scratch_operands = 0 : i64, tpu.core_type = #tpu.core_type<tc>} {
    %c0 = arith.constant 0 : index
    %c0_0 = arith.constant 0 : index
    %0 = vector.load %arg0[%c0, %c0_0] : memref<64x1xi32, #tpu.memory_space<vmem>>, vector<64x1xi32>
    %1 = tpu.iota {dimensions = array<i32: 1>} : vector<64x50xi32>
    %2 = vector.broadcast %0 : vector<64x1xi32> to vector<64x50xi32>
    %3 = arith.cmpi eq, %1, %2 : vector<64x50xi32>
    %4 = arith.extui %3 : vector<64x50xi1> to vector<64x50xi32>
    %5 = arith.sitofp %4 : vector<64x50xi32> to vector<64x50xf32>
    %c0_1 = arith.constant 0 : index
    %c0_2 = arith.constant 0 : index
    %6 = vector.load %arg1[%c0_1, %c0_2] : memref<50x32xf32, #tpu.memory_space<vmem>>, vector<50x32xf32>
    %cst = arith.constant dense<0.000000e+00> : vector<64x32xf32>
    %7 = tpu.matmul %5, %6, %cst {dimension_numbers = #tpu.dot_dimension_numbers<[1], [0], [0], [1], [0, 0, 1, 1], [], []>} : vector<64x50xf32>, vector<50x32xf32>, vector<64x32xf32> -> vector<64x32xf32>
    %c0_3 = arith.constant 0 : index
    %c0_4 = arith.constant 0 : index
    %8 = vector.load %arg2[%c0_3, %c0_4] : memref<32x32xf32, #tpu.memory_space<vmem>>, vector<32x32xf32>
    %cst_5 = arith.constant dense<0.000000e+00> : vector<64x32xf32>
    %9 = tpu.matmul %7, %8, %cst_5 {dimension_numbers = #tpu.dot_dimension_numbers<[1], [0], [0], [1], [0, 0, 1, 1], [], []>} : vector<64x32xf32>, vector<32x32xf32>, vector<64x32xf32> -> vector<64x32xf32>
    %c0_6 = arith.constant 0 : index
    %c0_7 = arith.constant 0 : index
    %10 = vector.load %arg3[%c0_6, %c0_7] : memref<1x32xf32, #tpu.memory_space<vmem>>, vector<1x32xf32>
    %11 = vector.broadcast %10 : vector<1x32xf32> to vector<64x32xf32>
    %12 = arith.addf %9, %11 : vector<64x32xf32>
    %c0_8 = arith.constant 0 : index
    %c0_9 = arith.constant 0 : index
    %13 = vector.load %arg4[%c0_8, %c0_9] : memref<32x32xf32, #tpu.memory_space<vmem>>, vector<32x32xf32>
    %14 = vector.extract_strided_slice %12 {offsets = [0, 0], sizes = [8, 32], strides = [1, 1]} : vector<64x32xf32> to vector<8x32xf32>
    %15 = math.tanh %14 : vector<8x32xf32>
    %16 = vector.extract_strided_slice %12 {offsets = [8, 0], sizes = [8, 32], strides = [1, 1]} : vector<64x32xf32> to vector<8x32xf32>
    %cst_10 = arith.constant dense<0.000000e+00> : vector<8x32xf32>
    %17 = tpu.matmul %15, %13, %cst_10 {dimension_numbers = #tpu.dot_dimension_numbers<[1], [0], [0], [1], [0, 0, 1, 1], [], []>} : vector<8x32xf32>, vector<32x32xf32>, vector<8x32xf32> -> vector<8x32xf32>
    %18 = arith.addf %16, %17 : vector<8x32xf32>
    %19 = math.tanh %18 : vector<8x32xf32>
    %20 = vector.extract_strided_slice %12 {offsets = [16, 0], sizes = [8, 32], strides = [1, 1]} : vector<64x32xf32> to vector<8x32xf32>
    %cst_11 = arith.constant dense<0.000000e+00> : vector<8x32xf32>
    %21 = tpu.matmul %19, %13, %cst_11 {dimension_numbers = #tpu.dot_dimension_numbers<[1], [0], [0], [1], [0, 0, 1, 1], [], []>} : vector<8x32xf32>, vector<32x32xf32>, vector<8x32xf32> -> vector<8x32xf32>
    %22 = arith.addf %20, %21 : vector<8x32xf32>
    %23 = math.tanh %22 : vector<8x32xf32>
    %24 = vector.extract_strided_slice %12 {offsets = [24, 0], sizes = [8, 32], strides = [1, 1]} : vector<64x32xf32> to vector<8x32xf32>
    %cst_12 = arith.constant dense<0.000000e+00> : vector<8x32xf32>
    %25 = tpu.matmul %23, %13, %cst_12 {dimension_numbers = #tpu.dot_dimension_numbers<[1], [0], [0], [1], [0, 0, 1, 1], [], []>} : vector<8x32xf32>, vector<32x32xf32>, vector<8x32xf32> -> vector<8x32xf32>
    %26 = arith.addf %24, %25 : vector<8x32xf32>
    %27 = math.tanh %26 : vector<8x32xf32>
    %28 = vector.extract_strided_slice %12 {offsets = [32, 0], sizes = [8, 32], strides = [1, 1]} : vector<64x32xf32> to vector<8x32xf32>
    %cst_13 = arith.constant dense<0.000000e+00> : vector<8x32xf32>
    %29 = tpu.matmul %27, %13, %cst_13 {dimension_numbers = #tpu.dot_dimension_numbers<[1], [0], [0], [1], [0, 0, 1, 1], [], []>} : vector<8x32xf32>, vector<32x32xf32>, vector<8x32xf32> -> vector<8x32xf32>
    %30 = arith.addf %28, %29 : vector<8x32xf32>
    %31 = math.tanh %30 : vector<8x32xf32>
    %32 = vector.extract_strided_slice %12 {offsets = [40, 0], sizes = [8, 32], strides = [1, 1]} : vector<64x32xf32> to vector<8x32xf32>
    %cst_14 = arith.constant dense<0.000000e+00> : vector<8x32xf32>
    %33 = tpu.matmul %31, %13, %cst_14 {dimension_numbers = #tpu.dot_dimension_numbers<[1], [0], [0], [1], [0, 0, 1, 1], [], []>} : vector<8x32xf32>, vector<32x32xf32>, vector<8x32xf32> -> vector<8x32xf32>
    %34 = arith.addf %32, %33 : vector<8x32xf32>
    %35 = math.tanh %34 : vector<8x32xf32>
    %36 = vector.extract_strided_slice %12 {offsets = [48, 0], sizes = [8, 32], strides = [1, 1]} : vector<64x32xf32> to vector<8x32xf32>
    %cst_15 = arith.constant dense<0.000000e+00> : vector<8x32xf32>
    %37 = tpu.matmul %35, %13, %cst_15 {dimension_numbers = #tpu.dot_dimension_numbers<[1], [0], [0], [1], [0, 0, 1, 1], [], []>} : vector<8x32xf32>, vector<32x32xf32>, vector<8x32xf32> -> vector<8x32xf32>
    %38 = arith.addf %36, %37 : vector<8x32xf32>
    %39 = math.tanh %38 : vector<8x32xf32>
    %40 = vector.extract_strided_slice %12 {offsets = [56, 0], sizes = [8, 32], strides = [1, 1]} : vector<64x32xf32> to vector<8x32xf32>
    %cst_16 = arith.constant dense<0.000000e+00> : vector<8x32xf32>
    %41 = tpu.matmul %39, %13, %cst_16 {dimension_numbers = #tpu.dot_dimension_numbers<[1], [0], [0], [1], [0, 0, 1, 1], [], []>} : vector<8x32xf32>, vector<32x32xf32>, vector<8x32xf32> -> vector<8x32xf32>
    %42 = arith.addf %40, %41 : vector<8x32xf32>
    %43 = math.tanh %42 : vector<8x32xf32>
    %44 = tpu.concatenate %15, %19, %23, %27, %31, %35, %39, %43 in 1 : vector<8x32xf32>, vector<8x32xf32>, vector<8x32xf32>, vector<8x32xf32>, vector<8x32xf32>, vector<8x32xf32>, vector<8x32xf32>, vector<8x32xf32> -> vector<8x256xf32>
    %c0_17 = arith.constant 0 : index
    %c0_18 = arith.constant 0 : index
    %45 = vector.load %arg9[%c0_17, %c0_18] : memref<8x256xf32, #tpu.memory_space<vmem>>, vector<8x256xf32>
    tpu.vector_store %arg9[%c0_17, %c0_18], %44 {strides = array<i32>} : memref<8x256xf32, #tpu.memory_space<vmem>>, vector<8x256xf32>,
    %c0_19 = arith.constant 0 : index
    %c0_20 = arith.constant 0 : index
    %46 = vector.load %arg5[%c0_19, %c0_20] : memref<32x32xf32, #tpu.memory_space<vmem>>, vector<32x32xf32>
    %cst_21 = arith.constant dense<0.000000e+00> : vector<8x32xf32>
    %47 = tpu.matmul %43, %46, %cst_21 {dimension_numbers = #tpu.dot_dimension_numbers<[1], [0], [0], [1], [0, 0, 1, 1], [], []>} : vector<8x32xf32>, vector<32x32xf32>, vector<8x32xf32> -> vector<8x32xf32>
    %c0_22 = arith.constant 0 : index
    %c0_23 = arith.constant 0 : index
    %48 = vector.load %arg6[%c0_22, %c0_23] : memref<1x32xf32, #tpu.memory_space<vmem>>, vector<1x32xf32>
    %49 = vector.broadcast %48 : vector<1x32xf32> to vector<8x32xf32>
    %50 = arith.addf %47, %49 : vector<8x32xf32>
    %cst_24 = arith.constant 0.000000e+00 : f32
    %51 = vector.broadcast %cst_24 : f32 to vector<8x32xf32>
    %52 = arith.maximumf %50, %51 : vector<8x32xf32>
    %c0_25 = arith.constant 0 : index
    %c0_26 = arith.constant 0 : index
    %53 = vector.load %arg7[%c0_25, %c0_26] : memref<32x32xf32, #tpu.memory_space<vmem>>, vector<32x32xf32>
    %cst_27 = arith.constant dense<0.000000e+00> : vector<8x32xf32>
    %54 = tpu.matmul %52, %53, %cst_27 {dimension_numbers = #tpu.dot_dimension_numbers<[1], [0], [0], [1], [0, 0, 1, 1], [], []>} : vector<8x32xf32>, vector<32x32xf32>, vector<8x32xf32> -> vector<8x32xf32>
    %c0_28 = arith.constant 0 : index
    %c0_29 = arith.constant 0 : index
    %55 = vector.load %arg8[%c0_28, %c0_29] : memref<1x32xf32, #tpu.memory_space<vmem>>, vector<1x32xf32>
    %56 = vector.broadcast %55 : vector<1x32xf32> to vector<8x32xf32>
    %57 = arith.addf %54, %56 : vector<8x32xf32>
    %58 = math.tanh %57 : vector<8x32xf32>
    %c0_30 = arith.constant 0 : index
    %c0_31 = arith.constant 0 : index
    %59 = vector.load %arg10[%c0_30, %c0_31] : memref<8x32xf32, #tpu.memory_space<vmem>>, vector<8x32xf32>
    tpu.vector_store %arg10[%c0_30, %c0_31], %58 {strides = array<i32>} : memref<8x32xf32, #tpu.memory_space<vmem>>, vector<8x32xf32>,
    return
  }
}

</mosaic_0001>

<llo_original>
// kernel: encoder_forward.1
$region0: #{encoder_forward.1}
  #allocation0 [shape = 'u32[]', space=smem, size = 0x4, offset = 0x4, fixed_abs, tag = 'smem constant byte address 0x4 - core index']
  #allocation1 [shape = 'u32[144,128]{1,0:T(1,128)}', space=vmem, size = 0x12000, scoped, tag = 'internal scratch']
  %s0 = inlined_call_operand.vmem [shape: s32[64,1], index: 0, kind: input, shape index: {}]
  %s1 = inlined_call_operand.vmem [shape: f32[50,32], index: 1, kind: input, shape index: {}]
  %s2 = inlined_call_operand.vmem [shape: f32[32,32], index: 2, kind: input, shape index: {}]
  %s3 = inlined_call_operand.vmem [shape: f32[1,32], index: 3, kind: input, shape index: {}]
  %s4 = inlined_call_operand.vmem [shape: f32[32,32], index: 4, kind: input, shape index: {}]
  %s5 = inlined_call_operand.vmem [shape: f32[32,32], index: 5, kind: input, shape index: {}]
  %s6 = inlined_call_operand.vmem [shape: f32[1,32], index: 6, kind: input, shape index: {}]
  %s7 = inlined_call_operand.vmem [shape: f32[32,32], index: 7, kind: input, shape index: {}]
  %s8 = inlined_call_operand.vmem [shape: f32[1,32], index: 8, kind: input, shape index: {}]
  %s9 = inlined_call_operand.vmem [shape: f32[8,256], index: 9, kind: output, shape index: {0}]
  %s10 = inlined_call_operand.vmem [shape: f32[8,32], index: 10, kind: output, shape index: {1}]
  %11 = xla_tuple %s9, %s10
  %s12 = sld [smem:[#allocation0]]
  $region54: #{encoder_forward.1} parent=0
    _
  %s14 = ssub.s32 1, %s12
  %s15 = scalar_select 0, %s14, %s12
  // Predicated region
  $region2: #{encoder_forward.1} parent=0 // pred_check
    _
  $region3: #{encoder_forward.1} parent=0 // pred_check_branch
    %17 = sbr.rel (0) target = $region5
  $region4: #{encoder_forward.1} parent=0 // pred_region
    _
  $region5: #{encoder_forward.1} parent=0 // pred_fallthru
    _
  // Predicated region
  $region6: #{encoder_forward.1} parent=0 // pred_check
    _
  $region7: #{encoder_forward.1} parent=0 // pred_check_branch
    %19 = sbr.rel (0) target = $region9
  $region8: #{encoder_forward.1} parent=0 // pred_region
    _
  $region9: #{encoder_forward.1} parent=0 // pred_fallthru
    _
  // Predicated region
  $region10: #{encoder_forward.1} parent=0 // pred_check
    _
  $region11: #{encoder_forward.1} parent=0 // pred_check_branch
    %21 = sbr.rel (0) target = $region13
  $region12: #{encoder_forward.1} parent=0 // pred_region
    _
  $region13: #{encoder_forward.1} parent=0 // pred_fallthru
    _
  // Predicated region
  $region14: #{encoder_forward.1} parent=0 // pred_check
    _
  $region15: #{encoder_forward.1} parent=0 // pred_check_branch
    %23 = sbr.rel (0) target = $region17
  $region16: #{encoder_forward.1} parent=0 // pred_region
    _
  $region17: #{encoder_forward.1} parent=0 // pred_fallthru
    _
  // Predicated region
  $region18: #{encoder_forward.1} parent=0 // pred_check
    _
  $region19: #{encoder_forward.1} parent=0 // pred_check_branch
    %25 = sbr.rel (0) target = $region21
  $region20: #{encoder_forward.1} parent=0 // pred_region
    _
  $region21: #{encoder_forward.1} parent=0 // pred_fallthru
    _
  // Predicated region
  $region22: #{encoder_forward.1} parent=0 // pred_check
    _
  $region23: #{encoder_forward.1} parent=0 // pred_check_branch
    %27 = sbr.rel (0) target = $region25
  $region24: #{encoder_forward.1} parent=0 // pred_region
    _
  $region25: #{encoder_forward.1} parent=0 // pred_fallthru
    _
  // Predicated region
  $region26: #{encoder_forward.1} parent=0 // pred_check
    _
  $region27: #{encoder_forward.1} parent=0 // pred_check_branch
    %29 = sbr.rel (0) target = $region29
  $region28: #{encoder_forward.1} parent=0 // pred_region
    _
  $region29: #{encoder_forward.1} parent=0 // pred_fallthru
    _
  // Predicated region
  $region30: #{encoder_forward.1} parent=0 // pred_check
    _
  $region31: #{encoder_forward.1} parent=0 // pred_check_branch
    %31 = sbr.rel (0) target = $region33
  $region32: #{encoder_forward.1} parent=0 // pred_region
    _
  $region33: #{encoder_forward.1} parent=0 // pred_fallthru
    _
  // Predicated region
  $region34: #{encoder_forward.1} parent=0 // pred_check
    _
  $region35: #{encoder_forward.1} parent=0 // pred_check_branch
    %33 = sbr.rel (0) target = $region37
  $region36: #{encoder_forward.1} parent=0 // pred_region
    _
  $region37: #{encoder_forward.1} parent=0 // pred_fallthru
    _
  %v34 = vld [vmem:[%s0] sm:$0xff]
  %v35 = vld [vmem:[%s0 + $0x8] sm:$0xff]
  %v36 = vld [vmem:[%s0 + $0x10] sm:$0xff]
  %v37 = vld [vmem:[%s0 + $0x18] sm:$0xff]
  %v38 = vld [vmem:[%s0 + $0x20] sm:$0xff]
  %v39 = vld [vmem:[%s0 + $0x28] sm:$0xff]
  %v40 = vld [vmem:[%s0 + $0x30] sm:$0xff]
  %v41 = vld [vmem:[%s0 + $0x38] sm:$0xff]
  %v42 = vlaneseq
  %v43 = vand.u32 %v42, 127
  %44 = vset.pattern.permute.xlu0 0
  %45 = vperm.xlu0 %44, %v34
  %v46 = vpop.permute.xlu0 %45
  %47 = vset.pattern.permute.xlu0 0
  %48 = vperm.xlu0 %47, %v35
  %v49 = vpop.permute.xlu0 %48
  %50 = vset.pattern.permute.xlu0 0
  %51 = vperm.xlu0 %50, %v36
  %v52 = vpop.permute.xlu0 %51
  %53 = vset.pattern.permute.xlu0 0
  %54 = vperm.xlu0 %53, %v37
  %v55 = vpop.permute.xlu0 %54
  %56 = vset.pattern.permute.xlu0 0
  %57 = vperm.xlu0 %56, %v38
  %v58 = vpop.permute.xlu0 %57
  %59 = vset.pattern.permute.xlu0 0
  %60 = vperm.xlu0 %59, %v39
  %v61 = vpop.permute.xlu0 %60
  %62 = vset.pattern.permute.xlu0 0
  %63 = vperm.xlu0 %62, %v40
  %v64 = vpop.permute.xlu0 %63
  %65 = vset.pattern.permute.xlu0 0
  %66 = vperm.xlu0 %65, %v41
  %v67 = vpop.permute.xlu0 %66
  %vm68 = vcmp.eq.s32.totalorder %v43, %v46
  %vm69 = vcmp.eq.s32.totalorder %v43, %v49
  %vm70 = vcmp.eq.s32.totalorder %v43, %v52
  %vm71 = vcmp.eq.s32.totalorder %v43, %v55
  %vm72 = vcmp.eq.s32.totalorder %v43, %v58
  %vm73 = vcmp.eq.s32.totalorder %v43, %v61
  %vm74 = vcmp.eq.s32.totalorder %v43, %v64
  %vm75 = vcmp.eq.s32.totalorder %v43, %v67
  %v76 = vsel %vm68, 1, 0
  %v77 = vsel %vm69, 1, 0
  %v78 = vsel %vm70, 1, 0
  %v79 = vsel %vm71, 1, 0
  %v80 = vsel %vm72, 1, 0
  %v81 = vsel %vm73, 1, 0
  %v82 = vsel %vm74, 1, 0
  %v83 = vsel %vm75, 1, 0
  %v84 = vcvt.s32.f32 %v76
  %v85 = vcvt.s32.f32 %v77
  %v86 = vcvt.s32.f32 %v78
  %v87 = vcvt.s32.f32 %v79
  %v88 = vcvt.s32.f32 %v80
  %v89 = vcvt.s32.f32 %v81
  %v90 = vcvt.s32.f32 %v82
  %v91 = vcvt.s32.f32 %v83
  %v92 = vld [vmem:[%s1] sm:$0xff]
  %v93 = vld [vmem:[%s1 + $0x8] sm:$0xff]
  %v94 = vld [vmem:[%s1 + $0x10] sm:$0xff]
  %v95 = vld [vmem:[%s1 + $0x18] sm:$0xff]
  %v96 = vld [vmem:[%s1 + $0x20] sm:$0xff]
  %v97 = vld [vmem:[%s1 + $0x28] sm:$0xff]
  %v98 = vld [vmem:[%s1 + $0x30] sm:$0x3]
  %vm99 = vcmask 408576
  %v101 = vsel %vm99, %v84, 0
  %v104 = vsel %vm99, %v85, 0
  %v107 = vsel %vm99, %v86, 0
  %v110 = vsel %vm99, %v87, 0
  %v113 = vsel %vm99, %v88, 0
  %v116 = vsel %vm99, %v89, 0
  %v119 = vsel %vm99, %v90, 0
  %v122 = vsel %vm99, %v91, 0
  %vm124 = vcmask 1041408
  %v126 = vsel %vm124, %v98, 0
  %128 = vmatprep.subr.mxu0 0.0
  %129 = vmatpush1.msra.mxu0 0.0
  %130 = vmatprep.subr.mxu0 0.0
  %131 = vmatpush1.msra.mxu0 0.0
  %132 = vmatprep.subr.mxu0 0.0
  %133 = vmatpush1.msra.mxu0 0.0
  %134 = vmatprep.subr.mxu0 0.0
  %135 = vmatpush1.msra.mxu0 0.0
  %136 = vmatprep.subr.mxu0 0.0
  %137 = vmatpush1.msra.mxu0 0.0
  %138 = vmatprep.subr.mxu0 0.0
  %139 = vmatpush1.msra.mxu0 0.0
  %140 = vmatprep.subr.mxu0 0.0
  %141 = vmatpush1.msra.mxu0 0.0
  %142 = vmatprep.subr.mxu0 0.0
  %143 = vmatpush1.msra.mxu0 0.0
  %144 = vmatprep.subr.mxu0 0.0
  %145 = vmatpush1.msra.mxu0 0.0
  %146 = vmatprep.subr.mxu0 0.0
  %147 = vmatpush1.msra.mxu0 %v126
  %148 = vmatprep.subr.mxu0 0.0
  %149 = vmatpush1.msra.mxu0 %v97
  %150 = vmatprep.subr.mxu0 0.0
  %151 = vmatpush1.msra.mxu0 %v96
  %152 = vmatprep.subr.mxu0 0.0
  %153 = vmatpush1.msra.mxu0 %v95
  %154 = vmatprep.subr.mxu0 0.0
  %155 = vmatpush1.msra.mxu0 %v94
  %156 = vmatprep.subr.mxu0 0.0
  %157 = vmatpush1.msra.mxu0 %v93
  %158 = vmatprep.subr.mxu0 0.0
  %159 = vmatpush1.msra.mxu0 %v92
  %160 = vmatprep.subr.mxu0 0.0
  %161 = vmatpush2.msra.mxu0 0.0
  %162 = vmatprep.subr.mxu0 0.0
  %163 = vmatpush2.msra.mxu0 0.0
  %164 = vmatprep.subr.mxu0 0.0
  %165 = vmatpush2.msra.mxu0 0.0
  %166 = vmatprep.subr.mxu0 0.0
  %167 = vmatpush2.msra.mxu0 0.0
  %168 = vmatprep.subr.mxu0 0.0
  %169 = vmatpush2.msra.mxu0 0.0
  %170 = vmatprep.subr.mxu0 0.0
  %171 = vmatpush2.msra.mxu0 0.0
  %172 = vmatprep.subr.mxu0 0.0
  %173 = vmatpush2.msra.mxu0 0.0
  %174 = vmatprep.subr.mxu0 0.0
  %175 = vmatpush2.msra.mxu0 0.0
  %176 = vmatprep.subr.mxu0 0.0
  %177 = vmatpush2.msra.mxu0 0.0
  %178 = vmatprep.subr.mxu0 0.0
  %179 = vmatpush2.msra.mxu0 0.0
  %180 = vmatprep.subr.mxu0 0.0
  %181 = vmatpush2.msra.mxu0 0.0
  %182 = vmatprep.subr.mxu0 0.0
  %183 = vmatpush2.msra.mxu0 0.0
  %184 = vmatprep.subr.mxu0 0.0
  %185 = vmatpush2.msra.mxu0 0.0
  %186 = vmatprep.subr.mxu0 0.0
  %187 = vmatpush2.msra.mxu0 0.0
  %188 = vmatprep.subr.mxu0 0.0
  %189 = vmatpush2.msra.mxu0 0.0
  %190 = vmatprep.subr.mxu0 0.0
  %191 = vmatpush2.msra.mxu0 0.0
  %192 = vmatprep.mubr.f32.mxu0 0.0
  %193 = vmatmul.mubr.f32.gmra.mxu0 %v101
  %v194 = vpop.f32.mrf.mxu0
  %v195 = vadd.f32 0.0, %v194
  %v196 = vpop.f32.mrf.mxu0
  %197 = vmatprep.mubr.f32.mxu0 0.0
  %198 = vmatmul.mubr.f32.gmra.mxu0 %v104
  %v199 = vpop.f32.mrf.mxu0
  %v200 = vadd.f32 0.0, %v199
  %v201 = vpop.f32.mrf.mxu0
  %202 = vmatprep.mubr.f32.mxu0 0.0
  %203 = vmatmul.mubr.f32.gmra.mxu0 %v107
  %v204 = vpop.f32.mrf.mxu0
  %v205 = vadd.f32 0.0, %v204
  %v206 = vpop.f32.mrf.mxu0
  %207 = vmatprep.mubr.f32.mxu0 0.0
  %208 = vmatmul.mubr.f32.gmra.mxu0 %v110
  %v209 = vpop.f32.mrf.mxu0
  %v210 = vadd.f32 0.0, %v209
  %v211 = vpop.f32.mrf.mxu0
  %212 = vmatprep.mubr.f32.mxu0 0.0
  %213 = vmatmul.mubr.f32.gmra.mxu0 %v113
  %v214 = vpop.f32.mrf.mxu0
  %v215 = vadd.f32 0.0, %v214
  %v216 = vpop.f32.mrf.mxu0
  %217 = vmatprep.mubr.f32.mxu0 0.0
  %218 = vmatmul.mubr.f32.gmra.mxu0 %v116
  %v219 = vpop.f32.mrf.mxu0
  %v220 = vadd.f32 0.0, %v219
  %v221 = vpop.f32.mrf.mxu0
  %222 = vmatprep.mubr.f32.mxu0 0.0
  %223 = vmatmul.mubr.f32.gmra.mxu0 %v119
  %v224 = vpop.f32.mrf.mxu0
  %v225 = vadd.f32 0.0, %v224
  %v226 = vpop.f32.mrf.mxu0
  %227 = vmatprep.mubr.f32.mxu0 0.0
  %228 = vmatmul.mubr.f32.gmra.mxu0 %v122
  %v229 = vpop.f32.mrf.mxu0
  %v230 = vadd.f32 0.0, %v229
  %v231 = vpop.f32.mrf.mxu0
  %232 = vdwg.mxu0
  %v233 = vld [vmem:[%s2] sm:$0xff]
  %v234 = vld [vmem:[%s2 + $0x8] sm:$0xff]
  %v235 = vld [vmem:[%s2 + $0x10] sm:$0xff]
  %v236 = vld [vmem:[%s2 + $0x18] sm:$0xff]
  %v237 = vld [vmem:[%s3] sm:$0x1]
  %v239 = vlaneseq
  %v240 = vshrl.u32 %v239, 7
  %v241 = vsub.s32 0, %v240
  %v242 = vrot.slane %v237, %v241
  %vm244 = vcmask 261120
  %v246 = vsel %vm244, %v195, 0
  %v249 = vsel %vm244, %v200, 0
  %v252 = vsel %vm244, %v205, 0
  %v255 = vsel %vm244, %v210, 0
  %v258 = vsel %vm244, %v215, 0
  %v261 = vsel %vm244, %v220, 0
  %v264 = vsel %vm244, %v225, 0
  %v267 = vsel %vm244, %v230, 0
  %269 = vmatprep.subr.mxu0 0.0
  %270 = vmatpush1.msra.mxu0 0.0
  %271 = vmatprep.subr.mxu0 0.0
  %272 = vmatpush1.msra.mxu0 0.0
  %273 = vmatprep.subr.mxu0 0.0
  %274 = vmatpush1.msra.mxu0 0.0
  %275 = vmatprep.subr.mxu0 0.0
  %276 = vmatpush1.msra.mxu0 0.0
  %277 = vmatprep.subr.mxu0 0.0
  %278 = vmatpush1.msra.mxu0 0.0
  %279 = vmatprep.subr.mxu0 0.0
  %280 = vmatpush1.msra.mxu0 0.0
  %281 = vmatprep.subr.mxu0 0.0
  %282 = vmatpush1.msra.mxu0 0.0
  %283 = vmatprep.subr.mxu0 0.0
  %284 = vmatpush1.msra.mxu0 0.0
  %285 = vmatprep.subr.mxu0 0.0
  %286 = vmatpush1.msra.mxu0 0.0
  %287 = vmatprep.subr.mxu0 0.0
  %288 = vmatpush1.msra.mxu0 0.0
  %289 = vmatprep.subr.mxu0 0.0
  %290 = vmatpush1.msra.mxu0 0.0
  %291 = vmatprep.subr.mxu0 0.0
  %292 = vmatpush1.msra.mxu0 0.0
  %293 = vmatprep.subr.mxu0 0.0
  %294 = vmatpush1.msra.mxu0 %v236
  %295 = vmatprep.subr.mxu0 0.0
  %296 = vmatpush1.msra.mxu0 %v235
  %297 = vmatprep.subr.mxu0 0.0
  %298 = vmatpush1.msra.mxu0 %v234
  %299 = vmatprep.subr.mxu0 0.0
  %300 = vmatpush1.msra.mxu0 %v233
  %301 = vmatprep.subr.mxu0 0.0
  %302 = vmatpush2.msra.mxu0 0.0
  %303 = vmatprep.subr.mxu0 0.0
  %304 = vmatpush2.msra.mxu0 0.0
  %305 = vmatprep.subr.mxu0 0.0
  %306 = vmatpush2.msra.mxu0 0.0
  %307 = vmatprep.subr.mxu0 0.0
  %308 = vmatpush2.msra.mxu0 0.0
  %309 = vmatprep.subr.mxu0 0.0
  %310 = vmatpush2.msra.mxu0 0.0
  %311 = vmatprep.subr.mxu0 0.0
  %312 = vmatpush2.msra.mxu0 0.0
  %313 = vmatprep.subr.mxu0 0.0
  %314 = vmatpush2.msra.mxu0 0.0
  %315 = vmatprep.subr.mxu0 0.0
  %316 = vmatpush2.msra.mxu0 0.0
  %317 = vmatprep.subr.mxu0 0.0
  %318 = vmatpush2.msra.mxu0 0.0
  %319 = vmatprep.subr.mxu0 0.0
  %320 = vmatpush2.msra.mxu0 0.0
  %321 = vmatprep.subr.mxu0 0.0
  %322 = vmatpush2.msra.mxu0 0.0
  %323 = vmatprep.subr.mxu0 0.0
  %324 = vmatpush2.msra.mxu0 0.0
  %325 = vmatprep.subr.mxu0 0.0
  %326 = vmatpush2.msra.mxu0 0.0
  %327 = vmatprep.subr.mxu0 0.0
  %328 = vmatpush2.msra.mxu0 0.0
  %329 = vmatprep.subr.mxu0 0.0
  %330 = vmatpush2.msra.mxu0 0.0
  %331 = vmatprep.subr.mxu0 0.0
  %332 = vmatpush2.msra.mxu0 0.0
  %333 = vmatprep.mubr.f32.mxu0 0.0
  %334 = vmatmul.mubr.f32.gmra.mxu0 %v246
  %v335 = vpop.f32.mrf.mxu0
  %v336 = vadd.f32 %v242, %v335
  %v337 = vpop.f32.mrf.mxu0
  %338 = vmatprep.mubr.f32.mxu0 0.0
  %339 = vmatmul.mubr.f32.gmra.mxu0 %v249
  %v340 = vpop.f32.mrf.mxu0
  %v341 = vadd.f32 %v242, %v340
  %v342 = vpop.f32.mrf.mxu0
  %343 = vmatprep.mubr.f32.mxu0 0.0
  %344 = vmatmul.mubr.f32.gmra.mxu0 %v252
  %v345 = vpop.f32.mrf.mxu0
  %v346 = vadd.f32 %v242, %v345
  %v347 = vpop.f32.mrf.mxu0
  %348 = vmatprep.mubr.f32.mxu0 0.0
  %349 = vmatmul.mubr.f32.gmra.mxu0 %v255
  %v350 = vpop.f32.mrf.mxu0
  %v351 = vadd.f32 %v242, %v350
  %v352 = vpop.f32.mrf.mxu0
  %353 = vmatprep.mubr.f32.mxu0 0.0
  %354 = vmatmul.mubr.f32.gmra.mxu0 %v258
  %v355 = vpop.f32.mrf.mxu0
  %v356 = vadd.f32 %v242, %v355
  %v357 = vpop.f32.mrf.mxu0
  %358 = vmatprep.mubr.f32.mxu0 0.0
  %359 = vmatmul.mubr.f32.gmra.mxu0 %v261
  %v360 = vpop.f32.mrf.mxu0
  %v361 = vadd.f32 %v242, %v360
  %v362 = vpop.f32.mrf.mxu0
  %363 = vmatprep.mubr.f32.mxu0 0.0
  %364 = vmatmul.mubr.f32.gmra.mxu0 %v264
  %v365 = vpop.f32.mrf.mxu0
  %v366 = vadd.f32 %v242, %v365
  %v367 = vpop.f32.mrf.mxu0
  %368 = vmatprep.mubr.f32.mxu0 0.0
  %369 = vmatmul.mubr.f32.gmra.mxu0 %v267
  %v370 = vpop.f32.mrf.mxu0
  %v371 = vadd.f32 %v242, %v370
  %v372 = vpop.f32.mrf.mxu0
  %373 = vdwg.mxu0
  %v374 = vld [vmem:[%s4] sm:$0xff]
  %v375 = vld [vmem:[%s4 + $0x8] sm:$0xff]
  %v376 = vld [vmem:[%s4 + $0x10] sm:$0xff]
  %v377 = vld [vmem:[%s4 + $0x18] sm:$0xff]
  %v378 = vtanh.pop %v336
  %v380 = vsel %vm244, %v378, 0
  %382 = vmatprep.subr.mxu0 0.0
  %383 = vmatpush1.msra.mxu0 0.0
  %384 = vmatprep.subr.mxu0 0.0
  %385 = vmatpush1.msra.mxu0 0.0
  %386 = vmatprep.subr.mxu0 0.0
  %387 = vmatpush1.msra.mxu0 0.0
  %388 = vmatprep.subr.mxu0 0.0
  %389 = vmatpush1.msra.mxu0 0.0
  %390 = vmatprep.subr.mxu0 0.0
  %391 = vmatpush1.msra.mxu0 0.0
  %392 = vmatprep.subr.mxu0 0.0
  %393 = vmatpush1.msra.mxu0 0.0
  %394 = vmatprep.subr.mxu0 0.0
  %395 = vmatpush1.msra.mxu0 0.0
  %396 = vmatprep.subr.mxu0 0.0
  %397 = vmatpush1.msra.mxu0 0.0
  %398 = vmatprep.subr.mxu0 0.0
  %399 = vmatpush1.msra.mxu0 0.0
  %400 = vmatprep.subr.mxu0 0.0
  %401 = vmatpush1.msra.mxu0 0.0
  %402 = vmatprep.subr.mxu0 0.0
  %403 = vmatpush1.msra.mxu0 0.0
  %404 = vmatprep.subr.mxu0 0.0
  %405 = vmatpush1.msra.mxu0 0.0
  %406 = vmatprep.subr.mxu0 0.0
  %407 = vmatpush1.msra.mxu0 %v377
  %408 = vmatprep.subr.mxu0 0.0
  %409 = vmatpush1.msra.mxu0 %v376
  %410 = vmatprep.subr.mxu0 0.0
  %411 = vmatpush1.msra.mxu0 %v375
  %412 = vmatprep.subr.mxu0 0.0
  %413 = vmatpush1.msra.mxu0 %v374
  %414 = vmatprep.subr.mxu0 0.0
  %415 = vmatpush2.msra.mxu0 0.0
  %416 = vmatprep.subr.mxu0 0.0
  %417 = vmatpush2.msra.mxu0 0.0
  %418 = vmatprep.subr.mxu0 0.0
  %419 = vmatpush2.msra.mxu0 0.0
  %420 = vmatprep.subr.mxu0 0.0
  %421 = vmatpush2.msra.mxu0 0.0
  %422 = vmatprep.subr.mxu0 0.0
  %423 = vmatpush2.msra.mxu0 0.0
  %424 = vmatprep.subr.mxu0 0.0
  %425 = vmatpush2.msra.mxu0 0.0
  %426 = vmatprep.subr.mxu0 0.0
  %427 = vmatpush2.msra.mxu0 0.0
  %428 = vmatprep.subr.mxu0 0.0
  %429 = vmatpush2.msra.mxu0 0.0
  %430 = vmatprep.subr.mxu0 0.0
  %431 = vmatpush2.msra.mxu0 0.0
  %432 = vmatprep.subr.mxu0 0.0
  %433 = vmatpush2.msra.mxu0 0.0
  %434 = vmatprep.subr.mxu0 0.0
  %435 = vmatpush2.msra.mxu0 0.0
  %436 = vmatprep.subr.mxu0 0.0
  %437 = vmatpush2.msra.mxu0 0.0
  %438 = vmatprep.subr.mxu0 0.0
  %439 = vmatpush2.msra.mxu0 0.0
  %440 = vmatprep.subr.mxu0 0.0
  %441 = vmatpush2.msra.mxu0 0.0
  %442 = vmatprep.subr.mxu0 0.0
  %443 = vmatpush2.msra.mxu0 0.0
  %444 = vmatprep.subr.mxu0 0.0
  %445 = vmatpush2.msra.mxu0 0.0
  %446 = vmatprep.mubr.f32.mxu0 0.0
  %447 = vmatmul.mubr.f32.gmra.mxu0 %v380
  %v448 = vpop.f32.mrf.mxu0
  %v449 = vadd.f32 0.0, %v448
  %v450 = vpop.f32.mrf.mxu0
  %451 = vdwg.mxu0
  %v452 = vadd.f32 %v341, %v449
  %v453 = vtanh.pop %v452
  %v455 = vsel %vm244, %v453, 0
  %457 = vmatprep.subr.mxu0 0.0
  %458 = vmatpush1.msra.mxu0 0.0
  %459 = vmatprep.subr.mxu0 0.0
  %460 = vmatpush1.msra.mxu0 0.0
  %461 = vmatprep.subr.mxu0 0.0
  %462 = vmatpush1.msra.mxu0 0.0
  %463 = vmatprep.subr.mxu0 0.0
  %464 = vmatpush1.msra.mxu0 0.0
  %465 = vmatprep.subr.mxu0 0.0
  %466 = vmatpush1.msra.mxu0 0.0
  %467 = vmatprep.subr.mxu0 0.0
  %468 = vmatpush1.msra.mxu0 0.0
  %469 = vmatprep.subr.mxu0 0.0
  %470 = vmatpush1.msra.mxu0 0.0
  %471 = vmatprep.subr.mxu0 0.0
  %472 = vmatpush1.msra.mxu0 0.0
  %473 = vmatprep.subr.mxu0 0.0
  %474 = vmatpush1.msra.mxu0 0.0
  %475 = vmatprep.subr.mxu0 0.0
  %476 = vmatpush1.msra.mxu0 0.0
  %477 = vmatprep.subr.mxu0 0.0
  %478 = vmatpush1.msra.mxu0 0.0
  %479 = vmatprep.subr.mxu0 0.0
  %480 = vmatpush1.msra.mxu0 0.0
  %481 = vmatprep.subr.mxu0 0.0
  %482 = vmatpush1.msra.mxu0 %v377
  %483 = vmatprep.subr.mxu0 0.0
  %484 = vmatpush1.msra.mxu0 %v376
  %485 = vmatprep.subr.mxu0 0.0
  %486 = vmatpush1.msra.mxu0 %v375
  %487 = vmatprep.subr.mxu0 0.0
  %488 = vmatpush1.msra.mxu0 %v374
  %489 = vmatprep.subr.mxu0 0.0
  %490 = vmatpush2.msra.mxu0 0.0
  %491 = vmatprep.subr.mxu0 0.0
  %492 = vmatpush2.msra.mxu0 0.0
  %493 = vmatprep.subr.mxu0 0.0
  %494 = vmatpush2.msra.mxu0 0.0
  %495 = vmatprep.subr.mxu0 0.0
  %496 = vmatpush2.msra.mxu0 0.0
  %497 = vmatprep.subr.mxu0 0.0
  %498 = vmatpush2.msra.mxu0 0.0
  %499 = vmatprep.subr.mxu0 0.0
  %500 = vmatpush2.msra.mxu0 0.0
  %501 = vmatprep.subr.mxu0 0.0
  %502 = vmatpush2.msra.mxu0 0.0
  %503 = vmatprep.subr.mxu0 0.0
  %504 = vmatpush2.msra.mxu0 0.0
  %505 = vmatprep.subr.mxu0 0.0
  %506 = vmatpush2.msra.mxu0 0.0
  %507 = vmatprep.subr.mxu0 0.0
  %508 = vmatpush2.msra.mxu0 0.0
  %509 = vmatprep.subr.mxu0 0.0
  %510 = vmatpush2.msra.mxu0 0.0
  %511 = vmatprep.subr.mxu0 0.0
  %512 = vmatpush2.msra.mxu0 0.0
  %513 = vmatprep.subr.mxu0 0.0
  %514 = vmatpush2.msra.mxu0 0.0
  %515 = vmatprep.subr.mxu0 0.0
  %516 = vmatpush2.msra.mxu0 0.0
  %517 = vmatprep.subr.mxu0 0.0
  %518 = vmatpush2.msra.mxu0 0.0
  %519 = vmatprep.subr.mxu0 0.0
  %520 = vmatpush2.msra.mxu0 0.0
  %521 = vmatprep.mubr.f32.mxu0 0.0
  %522 = vmatmul.mubr.f32.gmra.mxu0 %v455
  %v523 = vpop.f32.mrf.mxu0
  %v524 = vadd.f32 0.0, %v523
  %v525 = vpop.f32.mrf.mxu0
  %526 = vdwg.mxu0
  %v527 = vadd.f32 %v346, %v524
  %v528 = vtanh.pop %v527
  %v530 = vsel %vm244, %v528, 0
  %532 = vmatprep.subr.mxu0 0.0
  %533 = vmatpush1.msra.mxu0 0.0
  %534 = vmatprep.subr.mxu0 0.0
  %535 = vmatpush1.msra.mxu0 0.0
  %536 = vmatprep.subr.mxu0 0.0
  %537 = vmatpush1.msra.mxu0 0.0
  %538 = vmatprep.subr.mxu0 0.0
  %539 = vmatpush1.msra.mxu0 0.0
  %540 = vmatprep.subr.mxu0 0.0
  %541 = vmatpush1.msra.mxu0 0.0
  %542 = vmatprep.subr.mxu0 0.0
  %543 = vmatpush1.msra.mxu0 0.0
  %544 = vmatprep.subr.mxu0 0.0
  %545 = vmatpush1.msra.mxu0 0.0
  %546 = vmatprep.subr.mxu0 0.0
  %547 = vmatpush1.msra.mxu0 0.0
  %548 = vmatprep.subr.mxu0 0.0
  %549 = vmatpush1.msra.mxu0 0.0
  %550 = vmatprep.subr.mxu0 0.0
  %551 = vmatpush1.msra.mxu0 0.0
  %552 = vmatprep.subr.mxu0 0.0
  %553 = vmatpush1.msra.mxu0 0.0
  %554 = vmatprep.subr.mxu0 0.0
  %555 = vmatpush1.msra.mxu0 0.0
  %556 = vmatprep.subr.mxu0 0.0
  %557 = vmatpush1.msra.mxu0 %v377
  %558 = vmatprep.subr.mxu0 0.0
  %559 = vmatpush1.msra.mxu0 %v376
  %560 = vmatprep.subr.mxu0 0.0
  %561 = vmatpush1.msra.mxu0 %v375
  %562 = vmatprep.subr.mxu0 0.0
  %563 = vmatpush1.msra.mxu0 %v374
  %564 = vmatprep.subr.mxu0 0.0
  %565 = vmatpush2.msra.mxu0 0.0
  %566 = vmatprep.subr.mxu0 0.0
  %567 = vmatpush2.msra.mxu0 0.0
  %568 = vmatprep.subr.mxu0 0.0
  %569 = vmatpush2.msra.mxu0 0.0
  %570 = vmatprep.subr.mxu0 0.0
  %571 = vmatpush2.msra.mxu0 0.0
  %572 = vmatprep.subr.mxu0 0.0
  %573 = vmatpush2.msra.mxu0 0.0
  %574 = vmatprep.subr.mxu0 0.0
  %575 = vmatpush2.msra.mxu0 0.0
  %576 = vmatprep.subr.mxu0 0.0
  %577 = vmatpush2.msra.mxu0 0.0
  %578 = vmatprep.subr.mxu0 0.0
  %579 = vmatpush2.msra.mxu0 0.0
  %580 = vmatprep.subr.mxu0 0.0
  %581 = vmatpush2.msra.mxu0 0.0
  %582 = vmatprep.subr.mxu0 0.0
  %583 = vmatpush2.msra.mxu0 0.0
  %584 = vmatprep.subr.mxu0 0.0
  %585 = vmatpush2.msra.mxu0 0.0
  %586 = vmatprep.subr.mxu0 0.0
  %587 = vmatpush2.msra.mxu0 0.0
  %588 = vmatprep.subr.mxu0 0.0
  %589 = vmatpush2.msra.mxu0 0.0
  %590 = vmatprep.subr.mxu0 0.0
  %591 = vmatpush2.msra.mxu0 0.0
  %592 = vmatprep.subr.mxu0 0.0
  %593 = vmatpush2.msra.mxu0 0.0
  %594 = vmatprep.subr.mxu0 0.0
  %595 = vmatpush2.msra.mxu0 0.0
  %596 = vmatprep.mubr.f32.mxu0 0.0
  %597 = vmatmul.mubr.f32.gmra.mxu0 %v530
  %v598 = vpop.f32.mrf.mxu0
  %v599 = vadd.f32 0.0, %v598
  %v600 = vpop.f32.mrf.mxu0
  %601 = vdwg.mxu0
  %v602 = vadd.f32 %v351, %v599
  %v603 = vtanh.pop %v602
  %v605 = vsel %vm244, %v603, 0
  %607 = vmatprep.subr.mxu0 0.0
  %608 = vmatpush1.msra.mxu0 0.0
  %609 = vmatprep.subr.mxu0 0.0
  %610 = vmatpush1.msra.mxu0 0.0
  %611 = vmatprep.subr.mxu0 0.0
  %612 = vmatpush1.msra.mxu0 0.0
  %613 = vmatprep.subr.mxu0 0.0
  %614 = vmatpush1.msra.mxu0 0.0
  %615 = vmatprep.subr.mxu0 0.0
  %616 = vmatpush1.msra.mxu0 0.0
  %617 = vmatprep.subr.mxu0 0.0
  %618 = vmatpush1.msra.mxu0 0.0
  %619 = vmatprep.subr.mxu0 0.0
  %620 = vmatpush1.msra.mxu0 0.0
  %621 = vmatprep.subr.mxu0 0.0
  %622 = vmatpush1.msra.mxu0 0.0
  %623 = vmatprep.subr.mxu0 0.0
  %624 = vmatpush1.msra.mxu0 0.0
  %625 = vmatprep.subr.mxu0 0.0
  %626 = vmatpush1.msra.mxu0 0.0
  %627 = vmatprep.subr.mxu0 0.0
  %628 = vmatpush1.msra.mxu0 0.0
  %629 = vmatprep.subr.mxu0 0.0
  %630 = vmatpush1.msra.mxu0 0.0
  %631 = vmatprep.subr.mxu0 0.0
  %632 = vmatpush1.msra.mxu0 %v377
  %633 = vmatprep.subr.mxu0 0.0
  %634 = vmatpush1.msra.mxu0 %v376
  %635 = vmatprep.subr.mxu0 0.0
  %636 = vmatpush1.msra.mxu0 %v375
  %637 = vmatprep.subr.mxu0 0.0
  %638 = vmatpush1.msra.mxu0 %v374
  %639 = vmatprep.subr.mxu0 0.0
  %640 = vmatpush2.msra.mxu0 0.0
  %641 = vmatprep.subr.mxu0 0.0
  %642 = vmatpush2.msra.mxu0 0.0
  %643 = vmatprep.subr.mxu0 0.0
  %644 = vmatpush2.msra.mxu0 0.0
  %645 = vmatprep.subr.mxu0 0.0
  %646 = vmatpush2.msra.mxu0 0.0
  %647 = vmatprep.subr.mxu0 0.0
  %648 = vmatpush2.msra.mxu0 0.0
  %649 = vmatprep.subr.mxu0 0.0
  %650 = vmatpush2.msra.mxu0 0.0
  %651 = vmatprep.subr.mxu0 0.0
  %652 = vmatpush2.msra.mxu0 0.0
  %653 = vmatprep.subr.mxu0 0.0
  %654 = vmatpush2.msra.mxu0 0.0
  %655 = vmatprep.subr.mxu0 0.0
  %656 = vmatpush2.msra.mxu0 0.0
  %657 = vmatprep.subr.mxu0 0.0
  %658 = vmatpush2.msra.mxu0 0.0
  %659 = vmatprep.subr.mxu0 0.0
  %660 = vmatpush2.msra.mxu0 0.0
  %661 = vmatprep.subr.mxu0 0.0
  %662 = vmatpush2.msra.mxu0 0.0
  %663 = vmatprep.subr.mxu0 0.0
  %664 = vmatpush2.msra.mxu0 0.0
  %665 = vmatprep.subr.mxu0 0.0
  %666 = vmatpush2.msra.mxu0 0.0
  %667 = vmatprep.subr.mxu0 0.0
  %668 = vmatpush2.msra.mxu0 0.0
  %669 = vmatprep.subr.mxu0 0.0
  %670 = vmatpush2.msra.mxu0 0.0
  %671 = vmatprep.mubr.f32.mxu0 0.0
  %672 = vmatmul.mubr.f32.gmra.mxu0 %v605
  %v673 = vpop.f32.mrf.mxu0
  %v674 = vadd.f32 0.0, %v673
  %v675 = vpop.f32.mrf.mxu0
  %676 = vdwg.mxu0
  %v677 = vadd.f32 %v356, %v674
  %v678 = vtanh.pop %v677
  %v680 = vsel %vm244, %v678, 0
  %682 = vmatprep.subr.mxu0 0.0
  %683 = vmatpush1.msra.mxu0 0.0
  %684 = vmatprep.subr.mxu0 0.0
  %685 = vmatpush1.msra.mxu0 0.0
  %686 = vmatprep.subr.mxu0 0.0
  %687 = vmatpush1.msra.mxu0 0.0
  %688 = vmatprep.subr.mxu0 0.0
  %689 = vmatpush1.msra.mxu0 0.0
  %690 = vmatprep.subr.mxu0 0.0
  %691 = vmatpush1.msra.mxu0 0.0
  %692 = vmatprep.subr.mxu0 0.0
  %693 = vmatpush1.msra.mxu0 0.0
  %694 = vmatprep.subr.mxu0 0.0
  %695 = vmatpush1.msra.mxu0 0.0
  %696 = vmatprep.subr.mxu0 0.0
  %697 = vmatpush1.msra.mxu0 0.0
  %698 = vmatprep.subr.mxu0 0.0
  %699 = vmatpush1.msra.mxu0 0.0
  %700 = vmatprep.subr.mxu0 0.0
  %701 = vmatpush1.msra.mxu0 0.0
  %702 = vmatprep.subr.mxu0 0.0
  %703 = vmatpush1.msra.mxu0 0.0
  %704 = vmatprep.subr.mxu0 0.0
  %705 = vmatpush1.msra.mxu0 0.0
  %706 = vmatprep.subr.mxu0 0.0
  %707 = vmatpush1.msra.mxu0 %v377
  %708 = vmatprep.subr.mxu0 0.0
  %709 = vmatpush1.msra.mxu0 %v376
  %710 = vmatprep.subr.mxu0 0.0
  %711 = vmatpush1.msra.mxu0 %v375
  %712 = vmatprep.subr.mxu0 0.0
  %713 = vmatpush1.msra.mxu0 %v374
  %714 = vmatprep.subr.mxu0 0.0
  %715 = vmatpush2.msra.mxu0 0.0
  %716 = vmatprep.subr.mxu0 0.0
  %717 = vmatpush2.msra.mxu0 0.0
  %718 = vmatprep.subr.mxu0 0.0
  %719 = vmatpush2.msra.mxu0 0.0
  %720 = vmatprep.subr.mxu0 0.0
  %721 = vmatpush2.msra.mxu0 0.0
  %722 = vmatprep.subr.mxu0 0.0
  %723 = vmatpush2.msra.mxu0 0.0
  %724 = vmatprep.subr.mxu0 0.0
  %725 = vmatpush2.msra.mxu0 0.0
  %726 = vmatprep.subr.mxu0 0.0
  %727 = vmatpush2.msra.mxu0 0.0
  %728 = vmatprep.subr.mxu0 0.0
  %729 = vmatpush2.msra.mxu0 0.0
  %730 = vmatprep.subr.mxu0 0.0
  %731 = vmatpush2.msra.mxu0 0.0
  %732 = vmatprep.subr.mxu0 0.0
  %733 = vmatpush2.msra.mxu0 0.0
  %734 = vmatprep.subr.mxu0 0.0
  %735 = vmatpush2.msra.mxu0 0.0
  %736 = vmatprep.subr.mxu0 0.0
  %737 = vmatpush2.msra.mxu0 0.0
  %738 = vmatprep.subr.mxu0 0.0
  %739 = vmatpush2.msra.mxu0 0.0
  %740 = vmatprep.subr.mxu0 0.0
  %741 = vmatpush2.msra.mxu0 0.0
  %742 = vmatprep.subr.mxu0 0.0
  %743 = vmatpush2.msra.mxu0 0.0
  %744 = vmatprep.subr.mxu0 0.0
  %745 = vmatpush2.msra.mxu0 0.0
  %746 = vmatprep.mubr.f32.mxu0 0.0
  %747 = vmatmul.mubr.f32.gmra.mxu0 %v680
  %v748 = vpop.f32.mrf.mxu0
  %v749 = vadd.f32 0.0, %v748
  %v750 = vpop.f32.mrf.mxu0
  %751 = vdwg.mxu0
  %v752 = vadd.f32 %v361, %v749
  %v753 = vtanh.pop %v752
  %v755 = vsel %vm244, %v753, 0
  %757 = vmatprep.subr.mxu0 0.0
  %758 = vmatpush1.msra.mxu0 0.0
  %759 = vmatprep.subr.mxu0 0.0
  %760 = vmatpush1.msra.mxu0 0.0
  %761 = vmatprep.subr.mxu0 0.0
  %762 = vmatpush1.msra.mxu0 0.0
  %763 = vmatprep.subr.mxu0 0.0
  %764 = vmatpush1.msra.mxu0 0.0
  %765 = vmatprep.subr.mxu0 0.0
  %766 = vmatpush1.msra.mxu0 0.0
  %767 = vmatprep.subr.mxu0 0.0
  %768 = vmatpush1.msra.mxu0 0.0
  %769 = vmatprep.subr.mxu0 0.0
  %770 = vmatpush1.msra.mxu0 0.0
  %771 = vmatprep.subr.mxu0 0.0
  %772 = vmatpush1.msra.mxu0 0.0
  %773 = vmatprep.subr.mxu0 0.0
  %774 = vmatpush1.msra.mxu0 0.0
  %775 = vmatprep.subr.mxu0 0.0
  %776 = vmatpush1.msra.mxu0 0.0
  %777 = vmatprep.subr.mxu0 0.0
  %778 = vmatpush1.msra.mxu0 0.0
  %779 = vmatprep.subr.mxu0 0.0
  %780 = vmatpush1.msra.mxu0 0.0
  %781 = vmatprep.subr.mxu0 0.0
  %782 = vmatpush1.msra.mxu0 %v377
  %783 = vmatprep.subr.mxu0 0.0
  %784 = vmatpush1.msra.mxu0 %v376
  %785 = vmatprep.subr.mxu0 0.0
  %786 = vmatpush1.msra.mxu0 %v375
  %787 = vmatprep.subr.mxu0 0.0
  %788 = vmatpush1.msra.mxu0 %v374
  %789 = vmatprep.subr.mxu0 0.0
  %790 = vmatpush2.msra.mxu0 0.0
  %791 = vmatprep.subr.mxu0 0.0
  %792 = vmatpush2.msra.mxu0 0.0
  %793 = vmatprep.subr.mxu0 0.0
  %794 = vmatpush2.msra.mxu0 0.0
  %795 = vmatprep.subr.mxu0 0.0
  %796 = vmatpush2.msra.mxu0 0.0
  %797 = vmatprep.subr.mxu0 0.0
  %798 = vmatpush2.msra.mxu0 0.0
  %799 = vmatprep.subr.mxu0 0.0
  %800 = vmatpush2.msra.mxu0 0.0
  %801 = vmatprep.subr.mxu0 0.0
  %802 = vmatpush2.msra.mxu0 0.0
  %803 = vmatprep.subr.mxu0 0.0
  %804 = vmatpush2.msra.mxu0 0.0
  %805 = vmatprep.subr.mxu0 0.0
  %806 = vmatpush2.msra.mxu0 0.0
  %807 = vmatprep.subr.mxu0 0.0
  %808 = vmatpush2.msra.mxu0 0.0
  %809 = vmatprep.subr.mxu0 0.0
  %810 = vmatpush2.msra.mxu0 0.0
  %811 = vmatprep.subr.mxu0 0.0
  %812 = vmatpush2.msra.mxu0 0.0
  %813 = vmatprep.subr.mxu0 0.0
  %814 = vmatpush2.msra.mxu0 0.0
  %815 = vmatprep.subr.mxu0 0.0
  %816 = vmatpush2.msra.mxu0 0.0
  %817 = vmatprep.subr.mxu0 0.0
  %818 = vmatpush2.msra.mxu0 0.0
  %819 = vmatprep.subr.mxu0 0.0
  %820 = vmatpush2.msra.mxu0 0.0
  %821 = vmatprep.mubr.f32.mxu0 0.0
  %822 = vmatmul.mubr.f32.gmra.mxu0 %v755
  %v823 = vpop.f32.mrf.mxu0
  %v824 = vadd.f32 0.0, %v823
  %v825 = vpop.f32.mrf.mxu0
  %826 = vdwg.mxu0
  %v827 = vadd.f32 %v366, %v824
  %v828 = vtanh.pop %v827
  %v830 = vsel %vm244, %v828, 0
  %832 = vmatprep.subr.mxu0 0.0
  %833 = vmatpush1.msra.mxu0 0.0
  %834 = vmatprep.subr.mxu0 0.0
  %835 = vmatpush1.msra.mxu0 0.0
  %836 = vmatprep.subr.mxu0 0.0
  %837 = vmatpush1.msra.mxu0 0.0
  %838 = vmatprep.subr.mxu0 0.0
  %839 = vmatpush1.msra.mxu0 0.0
  %840 = vmatprep.subr.mxu0 0.0
  %841 = vmatpush1.msra.mxu0 0.0
  %842 = vmatprep.subr.mxu0 0.0
  %843 = vmatpush1.msra.mxu0 0.0
  %844 = vmatprep.subr.mxu0 0.0
  %845 = vmatpush1.msra.mxu0 0.0
  %846 = vmatprep.subr.mxu0 0.0
  %847 = vmatpush1.msra.mxu0 0.0
  %848 = vmatprep.subr.mxu0 0.0
  %849 = vmatpush1.msra.mxu0 0.0
  %850 = vmatprep.subr.mxu0 0.0
  %851 = vmatpush1.msra.mxu0 0.0
  %852 = vmatprep.subr.mxu0 0.0
  %853 = vmatpush1.msra.mxu0 0.0
  %854 = vmatprep.subr.mxu0 0.0
  %855 = vmatpush1.msra.mxu0 0.0
  %856 = vmatprep.subr.mxu0 0.0
  %857 = vmatpush1.msra.mxu0 %v377
  %858 = vmatprep.subr.mxu0 0.0
  %859 = vmatpush1.msra.mxu0 %v376
  %860 = vmatprep.subr.mxu0 0.0
  %861 = vmatpush1.msra.mxu0 %v375
  %862 = vmatprep.subr.mxu0 0.0
  %863 = vmatpush1.msra.mxu0 %v374
  %864 = vmatprep.subr.mxu0 0.0
  %865 = vmatpush2.msra.mxu0 0.0
  %866 = vmatprep.subr.mxu0 0.0
  %867 = vmatpush2.msra.mxu0 0.0
  %868 = vmatprep.subr.mxu0 0.0
  %869 = vmatpush2.msra.mxu0 0.0
  %870 = vmatprep.subr.mxu0 0.0
  %871 = vmatpush2.msra.mxu0 0.0
  %872 = vmatprep.subr.mxu0 0.0
  %873 = vmatpush2.msra.mxu0 0.0
  %874 = vmatprep.subr.mxu0 0.0
  %875 = vmatpush2.msra.mxu0 0.0
  %876 = vmatprep.subr.mxu0 0.0
  %877 = vmatpush2.msra.mxu0 0.0
  %878 = vmatprep.subr.mxu0 0.0
  %879 = vmatpush2.msra.mxu0 0.0
  %880 = vmatprep.subr.mxu0 0.0
  %881 = vmatpush2.msra.mxu0 0.0
  %882 = vmatprep.subr.mxu0 0.0
  %883 = vmatpush2.msra.mxu0 0.0
  %884 = vmatprep.subr.mxu0 0.0
  %885 = vmatpush2.msra.mxu0 0.0
  %886 = vmatprep.subr.mxu0 0.0
  %887 = vmatpush2.msra.mxu0 0.0
  %888 = vmatprep.subr.mxu0 0.0
  %889 = vmatpush2.msra.mxu0 0.0
  %890 = vmatprep.subr.mxu0 0.0
  %891 = vmatpush2.msra.mxu0 0.0
  %892 = vmatprep.subr.mxu0 0.0
  %893 = vmatpush2.msra.mxu0 0.0
  %894 = vmatprep.subr.mxu0 0.0
  %895 = vmatpush2.msra.mxu0 0.0
  %896 = vmatprep.mubr.f32.mxu0 0.0
  %897 = vmatmul.mubr.f32.gmra.mxu0 %v830
  %v898 = vpop.f32.mrf.mxu0
  %v899 = vadd.f32 0.0, %v898
  %v900 = vpop.f32.mrf.mxu0
  %901 = vdwg.mxu0
  %v902 = vadd.f32 %v371, %v899
  %v903 = vtanh.pop %v902
  %904 = vrot.lane.b32.xlu0 %v453, 32
  %v905 = vpop.permute.xlu0 %904
  %907 = vrot.lane.b32.xlu0 %v528, 64
  %v908 = vpop.permute.xlu0 %907
  %910 = vrot.lane.b32.xlu0 %v603, 96
  %v911 = vpop.permute.xlu0 %910
  %913 = vrot.lane.b32.xlu0 %v753, 32
  %v914 = vpop.permute.xlu0 %913
  %916 = vrot.lane.b32.xlu0 %v828, 64
  %v917 = vpop.permute.xlu0 %916
  %920 = vrot.lane.b32.xlu0 %v903, 96
  %v921 = vpop.permute.xlu0 %920
  %v923 = vsel %vm244, %v378, %v905
  %vm924 = vcmask 523264
  %v925 = vsel %vm924, %v923, %v908
  %vm926 = vcmask 785408
  %v927 = vsel %vm926, %v925, %v911
  %v928 = vsel %vm244, %v678, %v914
  %v929 = vsel %vm924, %v928, %v917
  %v930 = vsel %vm926, %v929, %v921
  %931 = vst [vmem:[%s9] sm:$0xff] %v927
  %932 = vst [vmem:[%s9 + $0x8] sm:$0xff] %v930
  %v933 = vld [vmem:[%s5] sm:$0xff]
  %v934 = vld [vmem:[%s5 + $0x8] sm:$0xff]
  %v935 = vld [vmem:[%s5 + $0x10] sm:$0xff]
  %v936 = vld [vmem:[%s5 + $0x18] sm:$0xff]
  %v937 = vld [vmem:[%s6] sm:$0x1]
  %v939 = vlaneseq
  %v940 = vshrl.u32 %v939, 7
  %v941 = vsub.s32 0, %v940
  %v942 = vrot.slane %v937, %v941
  %v944 = vsel %vm244, %v903, 0
  %946 = vmatprep.subr.mxu0 0.0
  %947 = vmatpush1.msra.mxu0 0.0
  %948 = vmatprep.subr.mxu0 0.0
  %949 = vmatpush1.msra.mxu0 0.0
  %950 = vmatprep.subr.mxu0 0.0
  %951 = vmatpush1.msra.mxu0 0.0
  %952 = vmatprep.subr.mxu0 0.0
  %953 = vmatpush1.msra.mxu0 0.0
  %954 = vmatprep.subr.mxu0 0.0
  %955 = vmatpush1.msra.mxu0 0.0
  %956 = vmatprep.subr.mxu0 0.0
  %957 = vmatpush1.msra.mxu0 0.0
  %958 = vmatprep.subr.mxu0 0.0
  %959 = vmatpush1.msra.mxu0 0.0
  %960 = vmatprep.subr.mxu0 0.0
  %961 = vmatpush1.msra.mxu0 0.0
  %962 = vmatprep.subr.mxu0 0.0
  %963 = vmatpush1.msra.mxu0 0.0
  %964 = vmatprep.subr.mxu0 0.0
  %965 = vmatpush1.msra.mxu0 0.0
  %966 = vmatprep.subr.mxu0 0.0
  %967 = vmatpush1.msra.mxu0 0.0
  %968 = vmatprep.subr.mxu0 0.0
  %969 = vmatpush1.msra.mxu0 0.0
  %970 = vmatprep.subr.mxu0 0.0
  %971 = vmatpush1.msra.mxu0 %v936
  %972 = vmatprep.subr.mxu0 0.0
  %973 = vmatpush1.msra.mxu0 %v935
  %974 = vmatprep.subr.mxu0 0.0
  %975 = vmatpush1.msra.mxu0 %v934
  %976 = vmatprep.subr.mxu0 0.0
  %977 = vmatpush1.msra.mxu0 %v933
  %978 = vmatprep.subr.mxu0 0.0
  %979 = vmatpush2.msra.mxu0 0.0
  %980 = vmatprep.subr.mxu0 0.0
  %981 = vmatpush2.msra.mxu0 0.0
  %982 = vmatprep.subr.mxu0 0.0
  %983 = vmatpush2.msra.mxu0 0.0
  %984 = vmatprep.subr.mxu0 0.0
  %985 = vmatpush2.msra.mxu0 0.0
  %986 = vmatprep.subr.mxu0 0.0
  %987 = vmatpush2.msra.mxu0 0.0
  %988 = vmatprep.subr.mxu0 0.0
  %989 = vmatpush2.msra.mxu0 0.0
  %990 = vmatprep.subr.mxu0 0.0
  %991 = vmatpush2.msra.mxu0 0.0
  %992 = vmatprep.subr.mxu0 0.0
  %993 = vmatpush2.msra.mxu0 0.0
  %994 = vmatprep.subr.mxu0 0.0
  %995 = vmatpush2.msra.mxu0 0.0
  %996 = vmatprep.subr.mxu0 0.0
  %997 = vmatpush2.msra.mxu0 0.0
  %998 = vmatprep.subr.mxu0 0.0
  %999 = vmatpush2.msra.mxu0 0.0
  %1000 = vmatprep.subr.mxu0 0.0
  %1001 = vmatpush2.msra.mxu0 0.0
  %1002 = vmatprep.subr.mxu0 0.0
  %1003 = vmatpush2.msra.mxu0 0.0
  %1004 = vmatprep.subr.mxu0 0.0
  %1005 = vmatpush2.msra.mxu0 0.0
  %1006 = vmatprep.subr.mxu0 0.0
  %1007 = vmatpush2.msra.mxu0 0.0
  %1008 = vmatprep.subr.mxu0 0.0
  %1009 = vmatpush2.msra.mxu0 0.0
  %1010 = vmatprep.mubr.f32.mxu0 0.0
  %1011 = vmatmul.mubr.f32.gmra.mxu0 %v944
  %v1012 = vpop.f32.mrf.mxu0
  %v1013 = vadd.f32 %v942, %v1012
  %v1014 = vpop.f32.mrf.mxu0
  %1015 = vdwg.mxu0
  %v1016 = vmax.f32 %v1013, 0.0
  %v1017 = vld [vmem:[%s7] sm:$0xff]
  %v1018 = vld [vmem:[%s7 + $0x8] sm:$0xff]
  %v1019 = vld [vmem:[%s7 + $0x10] sm:$0xff]
  %v1020 = vld [vmem:[%s7 + $0x18] sm:$0xff]
  %v1021 = vld [vmem:[%s8] sm:$0x1]
  %v1023 = vlaneseq
  %v1024 = vshrl.u32 %v1023, 7
  %v1025 = vsub.s32 0, %v1024
  %v1026 = vrot.slane %v1021, %v1025
  %v1029 = vsel %vm244, %v1016, 0
  %1031 = vmatprep.subr.mxu0 0.0
  %1032 = vmatpush1.msra.mxu0 0.0
  %1033 = vmatprep.subr.mxu0 0.0
  %1034 = vmatpush1.msra.mxu0 0.0
  %1035 = vmatprep.subr.mxu0 0.0
  %1036 = vmatpush1.msra.mxu0 0.0
  %1037 = vmatprep.subr.mxu0 0.0
  %1038 = vmatpush1.msra.mxu0 0.0
  %1039 = vmatprep.subr.mxu0 0.0
  %1040 = vmatpush1.msra.mxu0 0.0
  %1041 = vmatprep.subr.mxu0 0.0
  %1042 = vmatpush1.msra.mxu0 0.0
  %1043 = vmatprep.subr.mxu0 0.0
  %1044 = vmatpush1.msra.mxu0 0.0
  %1045 = vmatprep.subr.mxu0 0.0
  %1046 = vmatpush1.msra.mxu0 0.0
  %1047 = vmatprep.subr.mxu0 0.0
  %1048 = vmatpush1.msra.mxu0 0.0
  %1049 = vmatprep.subr.mxu0 0.0
  %1050 = vmatpush1.msra.mxu0 0.0
  %1051 = vmatprep.subr.mxu0 0.0
  %1052 = vmatpush1.msra.mxu0 0.0
  %1053 = vmatprep.subr.mxu0 0.0
  %1054 = vmatpush1.msra.mxu0 0.0
  %1055 = vmatprep.subr.mxu0 0.0
  %1056 = vmatpush1.msra.mxu0 %v1020
  %1057 = vmatprep.subr.mxu0 0.0
  %1058 = vmatpush1.msra.mxu0 %v1019
  %1059 = vmatprep.subr.mxu0 0.0
  %1060 = vmatpush1.msra.mxu0 %v1018
  %1061 = vmatprep.subr.mxu0 0.0
  %1062 = vmatpush1.msra.mxu0 %v1017
  %1063 = vmatprep.subr.mxu0 0.0
  %1064 = vmatpush2.msra.mxu0 0.0
  %1065 = vmatprep.subr.mxu0 0.0
  %1066 = vmatpush2.msra.mxu0 0.0
  %1067 = vmatprep.subr.mxu0 0.0
  %1068 = vmatpush2.msra.mxu0 0.0
  %1069 = vmatprep.subr.mxu0 0.0
  %1070 = vmatpush2.msra.mxu0 0.0
  %1071 = vmatprep.subr.mxu0 0.0
  %1072 = vmatpush2.msra.mxu0 0.0
  %1073 = vmatprep.subr.mxu0 0.0
  %1074 = vmatpush2.msra.mxu0 0.0
  %1075 = vmatprep.subr.mxu0 0.0
  %1076 = vmatpush2.msra.mxu0 0.0
  %1077 = vmatprep.subr.mxu0 0.0
  %1078 = vmatpush2.msra.mxu0 0.0
  %1079 = vmatprep.subr.mxu0 0.0
  %1080 = vmatpush2.msra.mxu0 0.0
  %1081 = vmatprep.subr.mxu0 0.0
  %1082 = vmatpush2.msra.mxu0 0.0
  %1083 = vmatprep.subr.mxu0 0.0
  %1084 = vmatpush2.msra.mxu0 0.0
  %1085 = vmatprep.subr.mxu0 0.0
  %1086 = vmatpush2.msra.mxu0 0.0
  %1087 = vmatprep.subr.mxu0 0.0
  %1088 = vmatpush2.msra.mxu0 0.0
  %1089 = vmatprep.subr.mxu0 0.0
  %1090 = vmatpush2.msra.mxu0 0.0
  %1091 = vmatprep.subr.mxu0 0.0
  %1092 = vmatpush2.msra.mxu0 0.0
  %1093 = vmatprep.subr.mxu0 0.0
  %1094 = vmatpush2.msra.mxu0 0.0
  %1095 = vmatprep.mubr.f32.mxu0 0.0
  %1096 = vmatmul.mubr.f32.gmra.mxu0 %v1029
  %v1097 = vpop.f32.mrf.mxu0
  %v1098 = vadd.f32 %v1026, %v1097
  %v1099 = vpop.f32.mrf.mxu0
  %1100 = vdwg.mxu0
  %v1101 = vtanh.pop %v1098
  %1102 = vst.msk [vmem:[%s10] sm:$0xff] %vm244, %v1101
  // Predicated region
  $region38: #{encoder_forward.1} parent=0 // pred_check
    _
  $region39: #{encoder_forward.1} parent=0 // pred_check_branch
    %1104 = sbr.rel (0) target = $region41
  $region40: #{encoder_forward.1} parent=0 // pred_region
    _
  $region41: #{encoder_forward.1} parent=0 // pred_fallthru
    _
  // Predicated region
  $region42: #{encoder_forward.1} parent=0 // pred_check
    _
  $region43: #{encoder_forward.1} parent=0 // pred_check_branch
    %1106 = sbr.rel (0) target = $region45
  $region44: #{encoder_forward.1} parent=0 // pred_region
    _
  $region45: #{encoder_forward.1} parent=0 // pred_fallthru
    _
  // Predicated region
  $region46: #{encoder_forward.1} parent=0 // pred_check
    _
  $region47: #{encoder_forward.1} parent=0 // pred_check_branch
    %1108 = sbr.rel (0) target = $region49
  $region48: #{encoder_forward.1} parent=0 // pred_region
    _
  $region49: #{encoder_forward.1} parent=0 // pred_fallthru
    _
  // Predicated region
  $region50: #{encoder_forward.1} parent=0 // pred_check
    _
  $region51: #{encoder_forward.1} parent=0 // pred_check_branch
    %1110 = sbr.rel (0) target = $region53
  $region52: #{encoder_forward.1} parent=0 // pred_region
    _
  $region53: #{encoder_forward.1} parent=0 // pred_fallthru
    _

</llo_original>
